<compile_context>
chip_gen: v7x
topology: tpu7x:2x2x1
jax: 0.10.0
libtpu: 0.0.40
codegen_flags: <defaults>
</compile_context>

<pallas_src>
import jax
import jax.numpy as jnp
from jax.experimental import pallas as pl
from jax.experimental.pallas import tpu as pltpu

LOG_STD_MIN, LOG_STD_MAX = -20.0, 2.0


# ------------------------------- kernel ---------------------------------

def actor_kernel(x_ref, w1_ref, w23_ref, w4_ref, b_ref, out_ref):
    """One batch tile of the fused Actor MLP.

    x_ref   : (TB, S)          f32, batch-tiled (auto-pipelined)
    w1_ref  : (S, H)           weight dtype, VMEM-resident (single copy)
    w23_ref : (2H, H)          W2 stacked over W3 (row slices are sublane-aligned)
    w4_ref  : (H, 2A)          fused mean || log_std head
    b_ref   : (4, max(H, 2A))  f32, row l = bias of layer l (prefix slices)
    out_ref : (TB, 2A)         f32, fused mean || log_std slab
    """
    H = w1_ref.shape[1]
    A2 = w4_ref.shape[1]
    A = A2 // 2
    wdt = w1_ref.dtype  # bf16 feeds the MXU natively on v6e/v7x; f32 keeps exact parity

    x = x_ref[...]

    # Biases stay f32: the VPU add/ReLU path is f32 on every generation (v5e has no bf16 VPU).
    b1 = b_ref[0:1, :H]
    b2 = b_ref[1:2, :H]
    b3 = b_ref[2:3, :H]
    b4 = b_ref[3:4, :A2]

    # Layer 1..3: Linear + ReLU (MXU matmul, f32 accumulate, f32 epilogue).
    h = jnp.dot(x.astype(wdt), w1_ref[...], preferred_element_type=jnp.float32) + b1
    h = jnp.maximum(h, 0.0)
    h = jnp.dot(h.astype(wdt), w23_ref[0:H, :], preferred_element_type=jnp.float32) + b2
    h = jnp.maximum(h, 0.0)
    h = jnp.dot(h.astype(wdt), w23_ref[H:2 * H, :], preferred_element_type=jnp.float32) + b3
    h = jnp.maximum(h, 0.0)

    # Fused output head: single [H, 2A] matmul -> one [TB, 2A] slab, one store.
    y = jnp.dot(h.astype(wdt), w4_ref[...], preferred_element_type=jnp.float32) + b4

    # Head-specific elementwise ops via a lane-index mask:
    #   cols [0, A)  -> mean    -> nan_to_num (nan->0, +/-inf->finfo max/min, as in torch)
    #   cols [A, 2A) -> log_std -> clamp(-20, 2)
    col = jax.lax.broadcasted_iota(jnp.int32, y.shape, dimension=1)
    mean_part = jnp.nan_to_num(y, nan=0.0)
    logstd_part = jnp.clip(y, LOG_STD_MIN, LOG_STD_MAX)
    out_ref[...] = jnp.where(col < A, mean_part, logstd_part).astype(out_ref.dtype)
    # TODO(synk): if action_dim grows, present a lane-dense output slab (k*2A multiple of
    # 128) via out_shape/out_spec instead of this 2A-wide masked store (biggest out_spec lever).


# --------------------------- tiling heuristics ---------------------------

def _round_up(x, m):
    return ((x + m - 1) // m) * m


def _padded_bytes(rows, cols, dtype):
    """VMEM footprint of a 2-D block: rows -> sublane granule, cols -> 128 lanes."""
    itemsize = jnp.dtype(dtype).itemsize
    sublane = max(8, 32 // itemsize)          # 8 for f32, 16 for bf16 (sublane packing)
    return _round_up(rows, sublane) * _round_up(cols, 128) * itemsize


def _tpu_vmem_and_multi_tc():
    """Returns (physical VMEM bytes per core, whether >=2 parallel grid steps help)."""
    vmem_capacity = 128 * 1024 * 1024
    multi_tc = False
    try:
        info = pltpu.get_tpu_info()
        vmem_capacity = int(getattr(info, "vmem_capacity_bytes", vmem_capacity))
    except Exception:
        pass
    try:
        kind = jax.devices()[0].device_kind.lower()
        # v4 / v5p megacore and v7x dual-TC: the "parallel" batch axis shards across cores.
        multi_tc = ("v4" in kind) or ("v5p" in kind) or ("v7" in kind) or ("tpu7" in kind)
        if ("v7" in kind) or ("tpu7" in kind):
            vmem_capacity = min(vmem_capacity, 64 * 1024 * 1024)
    except Exception:
        pass
    return vmem_capacity, multi_tc


def _vmem_limits(vmem_capacity):
    """(vmem_limit_bytes for the compiler, budget the tiler plans against)."""
    if vmem_capacity <= 64 * 1024 * 1024:
        limit = 56 * 1024 * 1024              # v7x: leave headroom under the 64 MiB ceiling
    else:
        limit = 100 * 1024 * 1024             # v5e/v6e: raise above the 32 MiB scoped default
    return limit, limit - 6 * 1024 * 1024     # extra slack for internal scratch / DMA metadata


def _choose_batch_tile(B, S, H, A2, w_dtype, vmem_budget, multi_tc):
    """Largest sublane-aligned batch tile that fits the padding-aware VMEM budget."""
    lanes = lambda n: _round_up(n, 128)
    # Resident (single-copy) weights + packed biases, plus headroom.
    fixed = (_padded_bytes(S, H, w_dtype)
             + _padded_bytes(2 * H, H, w_dtype)
             + _padded_bytes(H, A2, w_dtype)
             + _padded_bytes(4, max(H, A2), jnp.float32)
             + 2 * 1024 * 1024)
    # Per batch row (f32, lane-padded): pipelined in/out buffers + live slabs + epilogue temps.
    per_row = 4 * (2 * lanes(S)       # double-buffered state tile
                   + 2 * lanes(A2)    # double-buffered output tile
                   + 2 * lanes(H)     # live hidden activation slabs
                   + 4 * lanes(A2))   # y / nan_to_num / clip / iota-where temporaries
    if jnp.dtype(w_dtype) == jnp.dtype(jnp.bfloat16):
        per_row += 2 * (lanes(S) + lanes(H))   # bf16 casts of x / h feeding the MXU
    tb = (vmem_budget - fixed) // max(per_row, 1)
    tb = max(tb, 8)
    if multi_tc and B > 8:
        # Keep >=2 grid steps so the "parallel" batch axis spans both TensorCores.
        tb = min(tb, _round_up(pl.cdiv(B, 2), 8))
    if tb >= B:
        return B                               # full-array block (legal even if B % 8 != 0)
    return max(8, (tb // 8) * 8)               # sublane-aligned tile


# ------------------------------- wrapper ---------------------------------

def actor_forward(state, params, *, batch_tile=None):
    """state: [B, state_dim] float32. Returns (mean, log_std), each [B, action_dim]."""
    w1, w23, w4, b_all = params
    B, S = state.shape
    H = w1.shape[1]
    A2 = w4.shape[1]
    A = A2 // 2

    vmem_capacity, multi_tc = _tpu_vmem_and_multi_tc()
    vmem_limit, vmem_budget = _vmem_limits(vmem_capacity)

    if batch_tile is None:
        TB = _choose_batch_tile(B, S, H, A2, w1.dtype, vmem_budget, multi_tc)
    else:
        TB = min(int(batch_tile), B)
        if TB < B:
            TB = max(8, (TB // 8) * 8)
    grid = (pl.cdiv(B, TB),)

    # Constant weights/biases live whole in VMEM: single copy, no pipeline double-buffer.
    resident = pl.BlockSpec(memory_space=pltpu.MemorySpace.VMEM)

    grid_spec = pltpu.PrefetchScalarGridSpec(
        num_scalar_prefetch=0,
        grid=grid,
        in_specs=[
            pl.BlockSpec((TB, S), lambda i: (i, 0)),   # state: batch-tiled, auto-pipelined
            resident,                                  # w1         (S, H)
            resident,                                  # w2 || w3   (2H, H)
            resident,                                  # w4         (H, 2A)
            resident,                                  # packed biases (4, max(H, 2A))
        ],
        out_specs=pl.BlockSpec((TB, A2), lambda i: (i, 0)),  # single fused output slab
    )

    out = pl.pallas_call(
        actor_kernel,
        out_shape=jax.ShapeDtypeStruct((B, A2), jnp.float32),
        grid_spec=grid_spec,
        compiler_params=pltpu.CompilerParams(
            dimension_semantics=("parallel",),          # independent batch tiles
            vmem_limit_bytes=vmem_limit,
        ),
    )(state, w1, w23, w4, b_all)

    # Free slice in plain JAX == torch.split(x, action_dim, dim=-1)
    return out[:, :A], out[:, A:]


# --------------------- deterministic parameter init ---------------------

def orthogonal_init(key, out_dim, in_dim, gain):
    """Deterministic orthogonal init (same semantics as torch.nn.init.orthogonal_)."""
    rows, cols = out_dim, in_dim
    a = jax.random.normal(key, (max(rows, cols), min(rows, cols)), dtype=jnp.float32)
    q, r = jnp.linalg.qr(a)
    q = q * jnp.sign(jnp.diag(r))[None, :]
    if rows < cols:
        q = q.T
    return (gain * q[:rows, :cols]).astype(jnp.float32)


def make_actor_params(key, state_dim, action_dim, hidden_dim, weights_dtype=jnp.float32):
    ks = jax.random.split(key, 4)
    g = 2.0 ** 0.5
    # torch nn.Linear weights are [out, in]; transpose to [in, out] for x @ W.
    w1 = orthogonal_init(ks[0], hidden_dim, state_dim, g).T            # (S, H)
    w2 = orthogonal_init(ks[1], hidden_dim, hidden_dim, g).T           # (H, H)
    w3 = orthogonal_init(ks[2], hidden_dim, hidden_dim, g).T           # (H, H)
    w4 = orthogonal_init(ks[3], 2 * action_dim, hidden_dim, 0.01).T    # (H, 2A), kept fused
    w23 = jnp.concatenate([w2, w3], axis=0)                            # (2H, H)
    wdt = jnp.dtype(weights_dtype)
    # Packed zero biases (layer_init bias_const=0): row l = layer l bias, kept f32.
    b_all = jnp.zeros((4, max(hidden_dim, 2 * action_dim)), jnp.float32)
    return (w1.astype(wdt), w23.astype(wdt), w4.astype(wdt), b_all)


# --------------------------- pure-JAX reference ---------------------------

def actor_forward_ref(state, params):
    w1, w23, w4, b_all = params
    H = w1.shape[1]
    A2 = w4.shape[1]
    A = A2 // 2
    wdt = w1.dtype
    hp = jax.lax.Precision.HIGHEST
    f32 = jnp.float32
    b1, b2, b3, b4 = b_all[0:1, :H], b_all[1:2, :H], b_all[2:3, :H], b_all[3:4, :A2]
    h = jnp.maximum(jnp.dot(state.astype(wdt), w1, precision=hp, preferred_element_type=f32) + b1, 0.0)
    h = jnp.maximum(jnp.dot(h.astype(wdt), w23[:H], precision=hp, preferred_element_type=f32) + b2, 0.0)
    h = jnp.maximum(jnp.dot(h.astype(wdt), w23[H:], precision=hp, preferred_element_type=f32) + b3, 0.0)
    y = jnp.dot(h.astype(wdt), w4, precision=hp, preferred_element_type=f32) + b4
    mean, log_std = y[:, :A], y[:, A:]
    return jnp.nan_to_num(mean, nan=0.0), jnp.clip(log_std, LOG_STD_MIN, LOG_STD_MAX)


if __name__ == "__main__":
    key = jax.random.PRNGKey(0)
    k_param, k_s0, k_s1, k_s2 = jax.random.split(key, 4)

    batch, state_dim, action_dim, hidden_dim = 2, 16, 4, 32
    params = make_actor_params(k_param, state_dim, action_dim, hidden_dim)

    # Reference matmuls use Precision.HIGHEST; the kernel uses the MXU's default f32 path,
    # so allow a few e-3 of slack (outputs are O(0.1)).
    ATOL = RTOL = 5e-3

    # --- small shapes: single full-array block ---
    state = jax.random.normal(k_s0, (batch, state_dim), dtype=jnp.float32)
    mean, log_std = actor_forward(state, params)
    jax.block_until_ready((mean, log_std))
    mean_r, log_std_r = actor_forward_ref(state, params)
    assert mean.shape == (batch, action_dim) and log_std.shape == (batch, action_dim)
    assert jnp.allclose(mean, mean_r, atol=ATOL, rtol=RTOL)
    assert jnp.allclose(log_std, log_std_r, atol=ATOL, rtol=RTOL)

    # --- large batch: exercises the auto-sized tiled "parallel" grid path ---
    big_batch = 4096
    state_b = jax.random.normal(k_s1, (big_batch, state_dim), dtype=jnp.float32)
    mean_b, log_std_b = actor_forward(state_b, params)
    jax.block_until_ready((mean_b, log_std_b))
    mean_br, log_std_br = actor_forward_ref(state_b, params)
    assert jnp.allclose(mean_b, mean_br, atol=ATOL, rtol=RTOL)
    assert jnp.allclose(log_std_b, log_std_br, atol=ATOL, rtol=RTOL)

    # --- forced small tile: exercises a multi-step grid with a partial last batch tile ---
    part_batch = 1000
    state_p = jax.random.normal(k_s2, (part_batch, state_dim), dtype=jnp.float32)
    mean_p, log_std_p = actor_forward(state_p, params, batch_tile=128)
    jax.block_until_ready((mean_p, log_std_p))
    mean_pr, log_std_pr = actor_forward_ref(state_p, params)
    assert jnp.allclose(mean_p, mean_pr, atol=ATOL, rtol=RTOL)
    assert jnp.allclose(log_std_p, log_std_pr, atol=ATOL, rtol=RTOL)

    # --- bf16 weights path: MXU-native operands (v6e/v7x), f32 accumulate + f32 epilogue ---
    params_bf16 = make_actor_params(k_param, state_dim, action_dim, hidden_dim,
                                    weights_dtype=jnp.bfloat16)
    mean_h, log_std_h = actor_forward(state_b, params_bf16)
    jax.block_until_ready((mean_h, log_std_h))
    mean_hr, log_std_hr = actor_forward_ref(state_b, params_bf16)
    assert jnp.allclose(mean_h, mean_hr, atol=1e-2, rtol=1e-2)
    assert jnp.allclose(log_std_h, log_std_hr, atol=1e-2, rtol=1e-2)

    print("KERNEL_OK")
</pallas_src>

<mosaic_0001>
module attributes {stable_mosaic.version = 11 : i64} {
  func.func @actor_kernel(%arg0: i32, %arg1: memref<2x16xf32, #tpu.memory_space<vmem>>, %arg2: memref<16x32xf32, #tpu.memory_space<vmem>>, %arg3: memref<64x32xf32, #tpu.memory_space<vmem>>, %arg4: memref<32x8xf32, #tpu.memory_space<vmem>>, %arg5: memref<4x32xf32, #tpu.memory_space<vmem>>, %arg6: memref<2x8xf32, #tpu.memory_space<vmem>>) attributes {dimension_semantics = [#tpu.dimension_semantics<parallel>], iteration_bounds = array<i64: 1>, scalar_prefetch = 0 : i64, scratch_operands = 0 : i64, tpu.core_type = #tpu.core_type<tc>, window_params = [{transform_indices = @transform_0, window_bounds = array<i64: 2, 16>}, {pipeline_mode = #tpu.pipeline_mode<synchronous>, transform_indices = @transform_1, window_bounds = array<i64: 16, 32>}, {pipeline_mode = #tpu.pipeline_mode<synchronous>, transform_indices = @transform_2, window_bounds = array<i64: 64, 32>}, {pipeline_mode = #tpu.pipeline_mode<synchronous>, transform_indices = @transform_3, window_bounds = array<i64: 32, 8>}, {pipeline_mode = #tpu.pipeline_mode<synchronous>, transform_indices = @transform_4, window_bounds = array<i64: 4, 32>}, {transform_indices = @transform_5, window_bounds = array<i64: 2, 8>}]} {
    %c0 = arith.constant 0 : index
    %c0_0 = arith.constant 0 : index
    %0 = vector.load %arg1[%c0, %c0_0] : memref<2x16xf32, #tpu.memory_space<vmem>>, vector<2x16xf32>
    %c0_1 = arith.constant 0 : index
    %c0_2 = arith.constant 0 : index
    %1 = vector.load %arg5[%c0_1, %c0_2] : memref<4x32xf32, #tpu.memory_space<vmem>>, vector<1x32xf32>
    %c1 = arith.constant 1 : index
    %c0_3 = arith.constant 0 : index
    %2 = vector.load %arg5[%c1, %c0_3] : memref<4x32xf32, #tpu.memory_space<vmem>>, vector<1x32xf32>
    %c2 = arith.constant 2 : index
    %c0_4 = arith.constant 0 : index
    %3 = vector.load %arg5[%c2, %c0_4] : memref<4x32xf32, #tpu.memory_space<vmem>>, vector<1x32xf32>
    %c3 = arith.constant 3 : index
    %c0_5 = arith.constant 0 : index
    %4 = vector.load %arg5[%c3, %c0_5] : memref<4x32xf32, #tpu.memory_space<vmem>>, vector<1x8xf32>
    %c0_6 = arith.constant 0 : index
    %c0_7 = arith.constant 0 : index
    %5 = vector.load %arg2[%c0_6, %c0_7] : memref<16x32xf32, #tpu.memory_space<vmem>>, vector<16x32xf32>
    %cst = arith.constant dense<0.000000e+00> : vector<2x32xf32>
    %6 = tpu.matmul %0, %5, %cst {dimension_numbers = #tpu.dot_dimension_numbers<[1], [0], [0], [1], [0, 0, 1, 1], [], []>} : vector<2x16xf32>, vector<16x32xf32>, vector<2x32xf32> -> vector<2x32xf32>
    %7 = vector.broadcast %1 : vector<1x32xf32> to vector<2x32xf32>
    %8 = arith.addf %6, %7 : vector<2x32xf32>
    %cst_8 = arith.constant 0.000000e+00 : f32
    %9 = vector.broadcast %cst_8 : f32 to vector<2x32xf32>
    %10 = arith.maximumf %8, %9 : vector<2x32xf32>
    %c0_9 = arith.constant 0 : index
    %c0_10 = arith.constant 0 : index
    %11 = vector.load %arg3[%c0_9, %c0_10] : memref<64x32xf32, #tpu.memory_space<vmem>>, vector<32x32xf32>
    %cst_11 = arith.constant dense<0.000000e+00> : vector<2x32xf32>
    %12 = tpu.matmul %10, %11, %cst_11 {dimension_numbers = #tpu.dot_dimension_numbers<[1], [0], [0], [1], [0, 0, 1, 1], [], []>} : vector<2x32xf32>, vector<32x32xf32>, vector<2x32xf32> -> vector<2x32xf32>
    %13 = vector.broadcast %2 : vector<1x32xf32> to vector<2x32xf32>
    %14 = arith.addf %12, %13 : vector<2x32xf32>
    %cst_12 = arith.constant 0.000000e+00 : f32
    %15 = vector.broadcast %cst_12 : f32 to vector<2x32xf32>
    %16 = arith.maximumf %14, %15 : vector<2x32xf32>
    %c32 = arith.constant 32 : index
    %c0_13 = arith.constant 0 : index
    %17 = vector.load %arg3[%c32, %c0_13] : memref<64x32xf32, #tpu.memory_space<vmem>>, vector<32x32xf32>
    %cst_14 = arith.constant dense<0.000000e+00> : vector<2x32xf32>
    %18 = tpu.matmul %16, %17, %cst_14 {dimension_numbers = #tpu.dot_dimension_numbers<[1], [0], [0], [1], [0, 0, 1, 1], [], []>} : vector<2x32xf32>, vector<32x32xf32>, vector<2x32xf32> -> vector<2x32xf32>
    %19 = vector.broadcast %3 : vector<1x32xf32> to vector<2x32xf32>
    %20 = arith.addf %18, %19 : vector<2x32xf32>
    %cst_15 = arith.constant 0.000000e+00 : f32
    %21 = vector.broadcast %cst_15 : f32 to vector<2x32xf32>
    %22 = arith.maximumf %20, %21 : vector<2x32xf32>
    %c0_16 = arith.constant 0 : index
    %c0_17 = arith.constant 0 : index
    %23 = vector.load %arg4[%c0_16, %c0_17] : memref<32x8xf32, #tpu.memory_space<vmem>>, vector<32x8xf32>
    %cst_18 = arith.constant dense<0.000000e+00> : vector<2x8xf32>
    %24 = tpu.matmul %22, %23, %cst_18 {dimension_numbers = #tpu.dot_dimension_numbers<[1], [0], [0], [1], [0, 0, 1, 1], [], []>} : vector<2x32xf32>, vector<32x8xf32>, vector<2x8xf32> -> vector<2x8xf32>
    %25 = vector.broadcast %4 : vector<1x8xf32> to vector<2x8xf32>
    %26 = arith.addf %24, %25 : vector<2x8xf32>
    %27 = tpu.iota {dimensions = array<i32: 1>} : vector<2x8xi32>
    %cst_19 = arith.constant 0.000000e+00 : f32
    %28 = arith.cmpf one, %26, %26 : vector<2x8xf32>
    %29 = vector.broadcast %cst_19 : f32 to vector<2x8xf32>
    %30 = arith.select %28, %29, %26 : vector<2x8xi1>, vector<2x8xf32>
    %cst_20 = arith.constant 0x7F800000 : f32
    %31 = vector.broadcast %cst_20 : f32 to vector<2x8xf32>
    %32 = arith.cmpf oeq, %30, %31 : vector<2x8xf32>
    %cst_21 = arith.constant 3.40282347E+38 : f32
    %33 = vector.broadcast %cst_21 : f32 to vector<2x8xf32>
    %34 = arith.select %32, %33, %30 : vector<2x8xi1>, vector<2x8xf32>
    %cst_22 = arith.constant 0xFF800000 : f32
    %35 = vector.broadcast %cst_22 : f32 to vector<2x8xf32>
    %36 = arith.cmpf oeq, %34, %35 : vector<2x8xf32>
    %cst_23 = arith.constant -3.40282347E+38 : f32
    %37 = vector.broadcast %cst_23 : f32 to vector<2x8xf32>
    %38 = arith.select %36, %37, %34 : vector<2x8xi1>, vector<2x8xf32>
    %cst_24 = arith.constant -2.000000e+01 : f32
    %cst_25 = arith.constant 2.000000e+00 : f32
    %39 = vector.broadcast %cst_24 : f32 to vector<2x8xf32>
    %40 = arith.maximumf %39, %26 : vector<2x8xf32>
    %41 = vector.broadcast %cst_25 : f32 to vector<2x8xf32>
    %42 = arith.minimumf %41, %40 : vector<2x8xf32>
    %c4_i32 = arith.constant 4 : i32
    %43 = vector.broadcast %c4_i32 : i32 to vector<2x8xi32>
    %44 = arith.cmpi slt, %27, %43 : vector<2x8xi32>
    %45 = arith.select %44, %38, %42 : vector<2x8xi1>, vector<2x8xf32>
    %c0_26 = arith.constant 0 : index
    %c0_27 = arith.constant 0 : index
    %46 = vector.load %arg6[%c0_26, %c0_27] : memref<2x8xf32, #tpu.memory_space<vmem>>, vector<2x8xf32>
    tpu.vector_store %arg6[%c0_26, %c0_27], %45 {strides = array<i32>} : memref<2x8xf32, #tpu.memory_space<vmem>>, vector<2x8xf32>,
    return
  }
  func.func @transform_0(%arg0: i32) -> (i32, i32) {
    %c0_i32 = arith.constant 0 : i32
    %c0_i32_0 = arith.constant 0 : i32
    return %arg0, %c0_i32 : i32, i32
  }
  func.func @transform_1(%arg0: i32) -> (i32, i32) {
    %c0_i32 = arith.constant 0 : i32
    %c0_i32_0 = arith.constant 0 : i32
    %c0_i32_1 = arith.constant 0 : i32
    return %c0_i32, %c0_i32_0 : i32, i32
  }
  func.func @transform_2(%arg0: i32) -> (i32, i32) {
    %c0_i32 = arith.constant 0 : i32
    %c0_i32_0 = arith.constant 0 : i32
    %c0_i32_1 = arith.constant 0 : i32
    return %c0_i32, %c0_i32_0 : i32, i32
  }
  func.func @transform_3(%arg0: i32) -> (i32, i32) {
    %c0_i32 = arith.constant 0 : i32
    %c0_i32_0 = arith.constant 0 : i32
    %c0_i32_1 = arith.constant 0 : i32
    return %c0_i32, %c0_i32_0 : i32, i32
  }
  func.func @transform_4(%arg0: i32) -> (i32, i32) {
    %c0_i32 = arith.constant 0 : i32
    %c0_i32_0 = arith.constant 0 : i32
    %c0_i32_1 = arith.constant 0 : i32
    return %c0_i32, %c0_i32_0 : i32, i32
  }
  func.func @transform_5(%arg0: i32) -> (i32, i32) {
    %c0_i32 = arith.constant 0 : i32
    %c0_i32_0 = arith.constant 0 : i32
    return %arg0, %c0_i32 : i32, i32
  }
}

</mosaic_0001>

<llo_original>
// kernel: tpu_custom_call.1
$region0: #{tpu_custom_call.1}
  #allocation0 [shape = 'u32[]', space=smem, size = 0x4, offset = 0x4, fixed_abs, tag = 'smem constant byte address 0x4 - core index']
  #allocation1 [shape = 'u32[144,128]{1,0:T(1,128)}', space=vmem, size = 0x12000, scoped, tag = 'internal scratch']
  %s0 = inlined_call_operand.hbm [shape: f32[2,16], index: 0, kind: input, shape index: {}]
  %s1 = inlined_call_operand.hbm [shape: f32[16,32], index: 1, kind: input, shape index: {}]
  %s2 = inlined_call_operand.hbm [shape: f32[64,32], index: 2, kind: input, shape index: {}]
  %s3 = inlined_call_operand.hbm [shape: f32[32,8], index: 3, kind: input, shape index: {}]
  %s4 = inlined_call_operand.hbm [shape: f32[4,32], index: 4, kind: input, shape index: {}]
  %s5 = inlined_call_operand.hbm [shape: f32[2,8], index: 5, kind: output, shape index: {}]
  %s6 = sld [smem:[#allocation0]]
  $region50: #{tpu_custom_call.1} parent=0
    _
  %s8 = ssub.s32 1, %s6
  %s9 = scalar_select 0, %s8, %s6
  $region1: #{tpu_custom_call.1} parent=0
    #allocation2 [shape = 'u8[1024]{0}', space=vmem, size = 0x400, scoped, tag = 'input window, operand 0, single buffered']
    #allocation3 [shape = 's32[1]{0}', space=sflag, size = 0x4, scoped, tag = 'scoped memory for tpu_custom_call.1']
    #allocation4 [shape = 's32[1]{0}', space=sflag, size = 0x4, scoped, tag = 'scoped memory for tpu_custom_call.1']
    #allocation5 [shape = 'u8[8192]{0}', space=vmem, size = 0x2000, scoped, tag = 'input window, operand 1, single buffered']
    #allocation6 [shape = 's32[1]{0}', space=sflag, size = 0x4, scoped, tag = 'scoped memory for tpu_custom_call.1']
    #allocation7 [shape = 'u8[32768]{0}', space=vmem, size = 0x8000, scoped, tag = 'input window, operand 2, single buffered']
    #allocation8 [shape = 'u8[16384]{0}', space=vmem, size = 0x4000, scoped, tag = 'input window, operand 3, single buffered']
    #allocation9 [shape = 's32[1]{0}', space=sflag, size = 0x4, scoped, tag = 'scoped memory for tpu_custom_call.1']
    #allocation10 [shape = 'u8[2048]{0}', space=vmem, size = 0x800, scoped, tag = 'input window, operand 4, single buffered']
    #allocation11 [shape = 'u8[1024]{0}', space=vmem, size = 0x400, scoped, tag = 'output window, operand 0, single buffered']
    %10 = vsyncpa [#allocation3], 0
    %11 = vsyncpa [#allocation6], 0
    %12 = vsyncpa [#allocation9], 0
    %13 = vsyncpa [#allocation4], 0
    // Predicated region
    $region2: #{tpu_custom_call.1} parent=1 // pred_check
      _
    $region3: #{tpu_custom_call.1} parent=1 // pred_check_branch
      %15 = sbr.rel (0) target = $region5
    $region4: #{tpu_custom_call.1} parent=1 // pred_region
      %s17 = ssub.s32 32, 32
      %18 = vsyncadd [#allocation3], %s17
      %s20 = sshll.u32 [#allocation2], 4
      %s21 = int_to_ptr.vmem [resolvable:$true] %s20
      %23 = dma.hbm_to_vmem [thread:$0]  %s0, 32, %s21, [#allocation3]
    $region5: #{tpu_custom_call.1} parent=1 // pred_fallthru
      _
    // Predicated region
    $region6: #{tpu_custom_call.1} parent=1 // pred_check
      _
    $region7: #{tpu_custom_call.1} parent=1 // pred_check_branch
      %25 = sbr.rel (0) target = $region9
    $region8: #{tpu_custom_call.1} parent=1 // pred_region
      %s27 = ssub.s32 256, 256
      %28 = vsyncadd [#allocation6], %s27
      %s29 = sshll.u32 [#allocation5], 4
      %s30 = int_to_ptr.vmem [resolvable:$true] %s29
      %35 = dma.hbm_to_vmem [thread:$0]  %s1, 256, %s30, [#allocation6], 128, 128, 8
    $region9: #{tpu_custom_call.1} parent=1 // pred_fallthru
      _
    // Predicated region
    $region10: #{tpu_custom_call.1} parent=1 // pred_check
      _
    $region11: #{tpu_custom_call.1} parent=1 // pred_check_branch
      %37 = sbr.rel (0) target = $region13
    $region12: #{tpu_custom_call.1} parent=1 // pred_region
      %s39 = ssub.s32 1024, 1024
      %40 = vsyncadd [#allocation6], %s39
      %s41 = sshll.u32 [#allocation7], 4
      %s42 = int_to_ptr.vmem [resolvable:$true] %s41
      %47 = dma.hbm_to_vmem [thread:$0]  %s2, 1024, %s42, [#allocation6], 128, 128, 8
    $region13: #{tpu_custom_call.1} parent=1 // pred_fallthru
      _
    // Predicated region
    $region14: #{tpu_custom_call.1} parent=1 // pred_check
      _
    $region15: #{tpu_custom_call.1} parent=1 // pred_check_branch
      %49 = sbr.rel (0) target = $region17
    $region16: #{tpu_custom_call.1} parent=1 // pred_region
      %s51 = ssub.s32 512, 512
      %52 = vsyncadd [#allocation9], %s51
      %s53 = sshll.u32 [#allocation8], 4
      %s54 = int_to_ptr.vmem [resolvable:$true] %s53
      %59 = dma.hbm_to_vmem [thread:$0]  %s3, 512, %s54, [#allocation9], 128, 128, 8
    $region17: #{tpu_custom_call.1} parent=1 // pred_fallthru
      _
    // Predicated region
    $region18: #{tpu_custom_call.1} parent=1 // pred_check
      _
    $region19: #{tpu_custom_call.1} parent=1 // pred_check_branch
      %61 = sbr.rel (0) target = $region21
    $region20: #{tpu_custom_call.1} parent=1 // pred_region
      %s63 = ssub.s32 64, 64
      %64 = vsyncadd [#allocation9], %s63
      %s66 = sshll.u32 [#allocation10], 4
      %s67 = int_to_ptr.vmem [resolvable:$true] %s66
      %69 = dma.hbm_to_vmem [thread:$0]  %s4, 64, %s67, [#allocation9]
    $region21: #{tpu_custom_call.1} parent=1 // pred_fallthru
      _
    // Predicated region
    $region22: #{tpu_custom_call.1} parent=1 // pred_check
      _
    $region23: #{tpu_custom_call.1} parent=1 // pred_check_branch
      %71 = sbr.rel (0) target = $region25
    $region24: #{tpu_custom_call.1} parent=1 // pred_region
      %72 = dma.done [#allocation3], 32
    $region25: #{tpu_custom_call.1} parent=1 // pred_fallthru
      _
    // Predicated region
    $region26: #{tpu_custom_call.1} parent=1 // pred_check
      _
    $region27: #{tpu_custom_call.1} parent=1 // pred_check_branch
      %74 = sbr.rel (0) target = $region29
    $region28: #{tpu_custom_call.1} parent=1 // pred_region
      %75 = dma.done [#allocation6], 256
    $region29: #{tpu_custom_call.1} parent=1 // pred_fallthru
      _
    // Predicated region
    $region30: #{tpu_custom_call.1} parent=1 // pred_check
      _
    $region31: #{tpu_custom_call.1} parent=1 // pred_check_branch
      %77 = sbr.rel (0) target = $region33
    $region32: #{tpu_custom_call.1} parent=1 // pred_region
      %78 = dma.done [#allocation6], 1024
    $region33: #{tpu_custom_call.1} parent=1 // pred_fallthru
      _
    // Predicated region
    $region34: #{tpu_custom_call.1} parent=1 // pred_check
      _
    $region35: #{tpu_custom_call.1} parent=1 // pred_check_branch
      %80 = sbr.rel (0) target = $region37
    $region36: #{tpu_custom_call.1} parent=1 // pred_region
      %81 = dma.done [#allocation9], 512
    $region37: #{tpu_custom_call.1} parent=1 // pred_fallthru
      _
    // Predicated region
    $region38: #{tpu_custom_call.1} parent=1 // pred_check
      _
    $region39: #{tpu_custom_call.1} parent=1 // pred_check_branch
      %83 = sbr.rel (0) target = $region41
    $region40: #{tpu_custom_call.1} parent=1 // pred_region
      %84 = dma.done [#allocation9], 64
    $region41: #{tpu_custom_call.1} parent=1 // pred_fallthru
      _
    %v85 = vld [vmem:[#allocation2] sm:$0x3]
    %v86 = vld [vmem:[#allocation10] sm:$0x1]
    %v87 = vld [vmem:[#allocation10 + $0x1] sm:$0x1]
    %v88 = vld [vmem:[#allocation10 + $0x2] sm:$0x1]
    %v89 = vld [vmem:[#allocation10 + $0x3] sm:$0x1]
    %v90 = vld [vmem:[#allocation5] sm:$0xff]
    %v91 = vld [vmem:[#allocation5 + $0x8] sm:$0xff]
    %v92 = vlaneseq
    %v93 = vshrl.u32 %v92, 7
    %v94 = vsub.s32 0, %v93
    %v95 = vrot.slane %v86, %v94
    %vm96 = vcmask 130048
    %v98 = vsel %vm96, %v85, 0
    %100 = vmatprep.subr.mxu0 0.0
    %101 = vmatpush1.msra.mxu0 %v90
    %102 = vmatprep.subr.mxu0 0.0
    %103 = vmatpush1.msra.mxu0 %v91
    %104 = vmatprep.subr.mxu0 0.0
    %105 = vmatpush1.msra.mxu0 0.0
    %106 = vmatprep.subr.mxu0 0.0
    %107 = vmatpush1.msra.mxu0 0.0
    %108 = vmatprep.subr.mxu0 0.0
    %109 = vmatpush1.msra.mxu0 0.0
    %110 = vmatprep.subr.mxu0 0.0
    %111 = vmatpush1.msra.mxu0 0.0
    %112 = vmatprep.subr.mxu0 0.0
    %113 = vmatpush1.msra.mxu0 0.0
    %114 = vmatprep.subr.mxu0 0.0
    %115 = vmatpush1.msra.mxu0 0.0
    %116 = vmatprep.subr.mxu0 0.0
    %117 = vmatpush1.msra.mxu0 0.0
    %118 = vmatprep.subr.mxu0 0.0
    %119 = vmatpush1.msra.mxu0 0.0
    %120 = vmatprep.subr.mxu0 0.0
    %121 = vmatpush1.msra.mxu0 0.0
    %122 = vmatprep.subr.mxu0 0.0
    %123 = vmatpush1.msra.mxu0 0.0
    %124 = vmatprep.subr.mxu0 0.0
    %125 = vmatpush1.msra.mxu0 0.0
    %126 = vmatprep.subr.mxu0 0.0
    %127 = vmatpush1.msra.mxu0 0.0
    %128 = vmatprep.subr.mxu0 0.0
    %129 = vmatpush1.msra.mxu0 0.0
    %130 = vmatprep.subr.mxu0 0.0
    %131 = vmatpush1.msra.mxu0 0.0
    %132 = vmatprep.subr.mxu0 0.0
    %133 = vmatpush1.msra.mxu0 0.0
    %134 = vmatprep.subr.mxu0 0.0
    %135 = vmatpush1.msra.mxu0 0.0
    %136 = vmatprep.subr.mxu0 0.0
    %137 = vmatpush1.msra.mxu0 0.0
    %138 = vmatprep.subr.mxu0 0.0
    %139 = vmatpush1.msra.mxu0 0.0
    %140 = vmatprep.subr.mxu0 0.0
    %141 = vmatpush1.msra.mxu0 0.0
    %142 = vmatprep.subr.mxu0 0.0
    %143 = vmatpush1.msra.mxu0 0.0
    %144 = vmatprep.subr.mxu0 0.0
    %145 = vmatpush1.msra.mxu0 0.0
    %146 = vmatprep.subr.mxu0 0.0
    %147 = vmatpush1.msra.mxu0 0.0
    %148 = vmatprep.subr.mxu0 0.0
    %149 = vmatpush1.msra.mxu0 0.0
    %150 = vmatprep.subr.mxu0 0.0
    %151 = vmatpush1.msra.mxu0 0.0
    %152 = vmatprep.subr.mxu0 0.0
    %153 = vmatpush1.msra.mxu0 0.0
    %154 = vmatprep.subr.mxu0 0.0
    %155 = vmatpush1.msra.mxu0 0.0
    %156 = vmatprep.subr.mxu0 0.0
    %157 = vmatpush1.msra.mxu0 0.0
    %158 = vmatprep.subr.mxu0 0.0
    %159 = vmatpush1.msra.mxu0 0.0
    %160 = vmatprep.subr.mxu0 0.0
    %161 = vmatpush1.msra.mxu0 0.0
    %162 = vmatprep.subr.mxu0 0.0
    %163 = vmatpush1.msra.mxu0 0.0
    %164 = vmatprep.mubr.f32.mxu0 0.0
    %165 = vmatmul.mubr.f32.gmra.mrb[0].mxu0 %v98
    %v166 = vpop.f32.mrb[0].mxu0
    %v167 = vadd.f32 %v95, %v166
    %v168 = vpop.f32.mrb[0].mxu0
    %169 = vdwg.mxu0
    %v170 = vmax.f32 %v167, 0.0
    %v171 = vld [vmem:[#allocation7] sm:$0xff]
    %v172 = vld [vmem:[#allocation7 + $0x8] sm:$0xff]
    %v173 = vld [vmem:[#allocation7 + $0x10] sm:$0xff]
    %v174 = vld [vmem:[#allocation7 + $0x18] sm:$0xff]
    %v175 = vlaneseq
    %v176 = vshrl.u32 %v175, 7
    %v177 = vsub.s32 0, %v176
    %v178 = vrot.slane %v87, %v177
    %vm179 = vcmask 261120
    %v181 = vsel %vm179, %v170, 0
    %183 = vmatprep.subr.mxu0 0.0
    %184 = vmatpush1.msra.mxu0 %v171
    %185 = vmatprep.subr.mxu0 0.0
    %186 = vmatpush1.msra.mxu0 %v172
    %187 = vmatprep.subr.mxu0 0.0
    %188 = vmatpush1.msra.mxu0 %v173
    %189 = vmatprep.subr.mxu0 0.0
    %190 = vmatpush1.msra.mxu0 %v174
    %191 = vmatprep.subr.mxu0 0.0
    %192 = vmatpush1.msra.mxu0 0.0
    %193 = vmatprep.subr.mxu0 0.0
    %194 = vmatpush1.msra.mxu0 0.0
    %195 = vmatprep.subr.mxu0 0.0
    %196 = vmatpush1.msra.mxu0 0.0
    %197 = vmatprep.subr.mxu0 0.0
    %198 = vmatpush1.msra.mxu0 0.0
    %199 = vmatprep.subr.mxu0 0.0
    %200 = vmatpush1.msra.mxu0 0.0
    %201 = vmatprep.subr.mxu0 0.0
    %202 = vmatpush1.msra.mxu0 0.0
    %203 = vmatprep.subr.mxu0 0.0
    %204 = vmatpush1.msra.mxu0 0.0
    %205 = vmatprep.subr.mxu0 0.0
    %206 = vmatpush1.msra.mxu0 0.0
    %207 = vmatprep.subr.mxu0 0.0
    %208 = vmatpush1.msra.mxu0 0.0
    %209 = vmatprep.subr.mxu0 0.0
    %210 = vmatpush1.msra.mxu0 0.0
    %211 = vmatprep.subr.mxu0 0.0
    %212 = vmatpush1.msra.mxu0 0.0
    %213 = vmatprep.subr.mxu0 0.0
    %214 = vmatpush1.msra.mxu0 0.0
    %215 = vmatprep.subr.mxu0 0.0
    %216 = vmatpush1.msra.mxu0 0.0
    %217 = vmatprep.subr.mxu0 0.0
    %218 = vmatpush1.msra.mxu0 0.0
    %219 = vmatprep.subr.mxu0 0.0
    %220 = vmatpush1.msra.mxu0 0.0
    %221 = vmatprep.subr.mxu0 0.0
    %222 = vmatpush1.msra.mxu0 0.0
    %223 = vmatprep.subr.mxu0 0.0
    %224 = vmatpush1.msra.mxu0 0.0
    %225 = vmatprep.subr.mxu0 0.0
    %226 = vmatpush1.msra.mxu0 0.0
    %227 = vmatprep.subr.mxu0 0.0
    %228 = vmatpush1.msra.mxu0 0.0
    %229 = vmatprep.subr.mxu0 0.0
    %230 = vmatpush1.msra.mxu0 0.0
    %231 = vmatprep.subr.mxu0 0.0
    %232 = vmatpush1.msra.mxu0 0.0
    %233 = vmatprep.subr.mxu0 0.0
    %234 = vmatpush1.msra.mxu0 0.0
    %235 = vmatprep.subr.mxu0 0.0
    %236 = vmatpush1.msra.mxu0 0.0
    %237 = vmatprep.subr.mxu0 0.0
    %238 = vmatpush1.msra.mxu0 0.0
    %239 = vmatprep.subr.mxu0 0.0
    %240 = vmatpush1.msra.mxu0 0.0
    %241 = vmatprep.subr.mxu0 0.0
    %242 = vmatpush1.msra.mxu0 0.0
    %243 = vmatprep.subr.mxu0 0.0
    %244 = vmatpush1.msra.mxu0 0.0
    %245 = vmatprep.subr.mxu0 0.0
    %246 = vmatpush1.msra.mxu0 0.0
    %247 = vmatprep.mubr.f32.mxu0 0.0
    %248 = vmatmul.mubr.f32.gmra.mrb[0].mxu0 %v181
    %v249 = vpop.f32.mrb[0].mxu0
    %v250 = vadd.f32 %v178, %v249
    %v251 = vpop.f32.mrb[0].mxu0
    %252 = vdwg.mxu0
    %v253 = vmax.f32 %v250, 0.0
    %v254 = vld [vmem:[#allocation7 + $0x20] sm:$0xff]
    %v255 = vld [vmem:[#allocation7 + $0x28] sm:$0xff]
    %v256 = vld [vmem:[#allocation7 + $0x30] sm:$0xff]
    %v257 = vld [vmem:[#allocation7 + $0x38] sm:$0xff]
    %v258 = vlaneseq
    %v259 = vshrl.u32 %v258, 7
    %v260 = vsub.s32 0, %v259
    %v261 = vrot.slane %v88, %v260
    %v263 = vsel %vm179, %v253, 0
    %265 = vmatprep.subr.mxu0 0.0
    %266 = vmatpush1.msra.mxu0 %v254
    %267 = vmatprep.subr.mxu0 0.0
    %268 = vmatpush1.msra.mxu0 %v255
    %269 = vmatprep.subr.mxu0 0.0
    %270 = vmatpush1.msra.mxu0 %v256
    %271 = vmatprep.subr.mxu0 0.0
    %272 = vmatpush1.msra.mxu0 %v257
    %273 = vmatprep.subr.mxu0 0.0
    %274 = vmatpush1.msra.mxu0 0.0
    %275 = vmatprep.subr.mxu0 0.0
    %276 = vmatpush1.msra.mxu0 0.0
    %277 = vmatprep.subr.mxu0 0.0
    %278 = vmatpush1.msra.mxu0 0.0
    %279 = vmatprep.subr.mxu0 0.0
    %280 = vmatpush1.msra.mxu0 0.0
    %281 = vmatprep.subr.mxu0 0.0
    %282 = vmatpush1.msra.mxu0 0.0
    %283 = vmatprep.subr.mxu0 0.0
    %284 = vmatpush1.msra.mxu0 0.0
    %285 = vmatprep.subr.mxu0 0.0
    %286 = vmatpush1.msra.mxu0 0.0
    %287 = vmatprep.subr.mxu0 0.0
    %288 = vmatpush1.msra.mxu0 0.0
    %289 = vmatprep.subr.mxu0 0.0
    %290 = vmatpush1.msra.mxu0 0.0
    %291 = vmatprep.subr.mxu0 0.0
    %292 = vmatpush1.msra.mxu0 0.0
    %293 = vmatprep.subr.mxu0 0.0
    %294 = vmatpush1.msra.mxu0 0.0
    %295 = vmatprep.subr.mxu0 0.0
    %296 = vmatpush1.msra.mxu0 0.0
    %297 = vmatprep.subr.mxu0 0.0
    %298 = vmatpush1.msra.mxu0 0.0
    %299 = vmatprep.subr.mxu0 0.0
    %300 = vmatpush1.msra.mxu0 0.0
    %301 = vmatprep.subr.mxu0 0.0
    %302 = vmatpush1.msra.mxu0 0.0
    %303 = vmatprep.subr.mxu0 0.0
    %304 = vmatpush1.msra.mxu0 0.0
    %305 = vmatprep.subr.mxu0 0.0
    %306 = vmatpush1.msra.mxu0 0.0
    %307 = vmatprep.subr.mxu0 0.0
    %308 = vmatpush1.msra.mxu0 0.0
    %309 = vmatprep.subr.mxu0 0.0
    %310 = vmatpush1.msra.mxu0 0.0
    %311 = vmatprep.subr.mxu0 0.0
    %312 = vmatpush1.msra.mxu0 0.0
    %313 = vmatprep.subr.mxu0 0.0
    %314 = vmatpush1.msra.mxu0 0.0
    %315 = vmatprep.subr.mxu0 0.0
    %316 = vmatpush1.msra.mxu0 0.0
    %317 = vmatprep.subr.mxu0 0.0
    %318 = vmatpush1.msra.mxu0 0.0
    %319 = vmatprep.subr.mxu0 0.0
    %320 = vmatpush1.msra.mxu0 0.0
    %321 = vmatprep.subr.mxu0 0.0
    %322 = vmatpush1.msra.mxu0 0.0
    %323 = vmatprep.subr.mxu0 0.0
    %324 = vmatpush1.msra.mxu0 0.0
    %325 = vmatprep.subr.mxu0 0.0
    %326 = vmatpush1.msra.mxu0 0.0
    %327 = vmatprep.subr.mxu0 0.0
    %328 = vmatpush1.msra.mxu0 0.0
    %329 = vmatprep.mubr.f32.mxu0 0.0
    %330 = vmatmul.mubr.f32.gmra.mrb[0].mxu0 %v263
    %v331 = vpop.f32.mrb[0].mxu0
    %v332 = vadd.f32 %v261, %v331
    %v333 = vpop.f32.mrb[0].mxu0
    %334 = vdwg.mxu0
    %v335 = vmax.f32 %v332, 0.0
    %v336 = vld [vmem:[#allocation8] sm:$0xff]
    %v337 = vld [vmem:[#allocation8 + $0x8] sm:$0xff]
    %v338 = vld [vmem:[#allocation8 + $0x10] sm:$0xff]
    %v339 = vld [vmem:[#allocation8 + $0x18] sm:$0xff]
    %v340 = vlaneseq
    %v341 = vshrl.u32 %v340, 7
    %v342 = vsub.s32 0, %v341
    %v343 = vrot.slane %v89, %v342
    %v345 = vsel %vm179, %v335, 0
    %347 = vmatprep.subr.mxu0 0.0
    %348 = vmatpush1.msra.mxu0 %v336
    %349 = vmatprep.subr.mxu0 0.0
    %350 = vmatpush1.msra.mxu0 %v337
    %351 = vmatprep.subr.mxu0 0.0
    %352 = vmatpush1.msra.mxu0 %v338
    %353 = vmatprep.subr.mxu0 0.0
    %354 = vmatpush1.msra.mxu0 %v339
    %355 = vmatprep.subr.mxu0 0.0
    %356 = vmatpush1.msra.mxu0 0.0
    %357 = vmatprep.subr.mxu0 0.0
    %358 = vmatpush1.msra.mxu0 0.0
    %359 = vmatprep.subr.mxu0 0.0
    %360 = vmatpush1.msra.mxu0 0.0
    %361 = vmatprep.subr.mxu0 0.0
    %362 = vmatpush1.msra.mxu0 0.0
    %363 = vmatprep.subr.mxu0 0.0
    %364 = vmatpush1.msra.mxu0 0.0
    %365 = vmatprep.subr.mxu0 0.0
    %366 = vmatpush1.msra.mxu0 0.0
    %367 = vmatprep.subr.mxu0 0.0
    %368 = vmatpush1.msra.mxu0 0.0
    %369 = vmatprep.subr.mxu0 0.0
    %370 = vmatpush1.msra.mxu0 0.0
    %371 = vmatprep.subr.mxu0 0.0
    %372 = vmatpush1.msra.mxu0 0.0
    %373 = vmatprep.subr.mxu0 0.0
    %374 = vmatpush1.msra.mxu0 0.0
    %375 = vmatprep.subr.mxu0 0.0
    %376 = vmatpush1.msra.mxu0 0.0
    %377 = vmatprep.subr.mxu0 0.0
    %378 = vmatpush1.msra.mxu0 0.0
    %379 = vmatprep.subr.mxu0 0.0
    %380 = vmatpush1.msra.mxu0 0.0
    %381 = vmatprep.subr.mxu0 0.0
    %382 = vmatpush1.msra.mxu0 0.0
    %383 = vmatprep.subr.mxu0 0.0
    %384 = vmatpush1.msra.mxu0 0.0
    %385 = vmatprep.subr.mxu0 0.0
    %386 = vmatpush1.msra.mxu0 0.0
    %387 = vmatprep.subr.mxu0 0.0
    %388 = vmatpush1.msra.mxu0 0.0
    %389 = vmatprep.subr.mxu0 0.0
    %390 = vmatpush1.msra.mxu0 0.0
    %391 = vmatprep.subr.mxu0 0.0
    %392 = vmatpush1.msra.mxu0 0.0
    %393 = vmatprep.subr.mxu0 0.0
    %394 = vmatpush1.msra.mxu0 0.0
    %395 = vmatprep.subr.mxu0 0.0
    %396 = vmatpush1.msra.mxu0 0.0
    %397 = vmatprep.subr.mxu0 0.0
    %398 = vmatpush1.msra.mxu0 0.0
    %399 = vmatprep.subr.mxu0 0.0
    %400 = vmatpush1.msra.mxu0 0.0
    %401 = vmatprep.subr.mxu0 0.0
    %402 = vmatpush1.msra.mxu0 0.0
    %403 = vmatprep.subr.mxu0 0.0
    %404 = vmatpush1.msra.mxu0 0.0
    %405 = vmatprep.subr.mxu0 0.0
    %406 = vmatpush1.msra.mxu0 0.0
    %407 = vmatprep.subr.mxu0 0.0
    %408 = vmatpush1.msra.mxu0 0.0
    %409 = vmatprep.subr.mxu0 0.0
    %410 = vmatpush1.msra.mxu0 0.0
    %411 = vmatprep.mubr.f32.mxu0 0.0
    %412 = vmatmul.mubr.f32.gmra.mrb[0].mxu0 %v345
    %v413 = vpop.f32.mrb[0].mxu0
    %v414 = vadd.f32 %v343, %v413
    %v415 = vpop.f32.mrb[0].mxu0
    %416 = vdwg.mxu0
    %v417 = vlaneseq
    %v418 = vand.u32 %v417, 127
    %vm419 = vcmp.ne.f32.partialorder %v414, %v414
    %v420 = vsel %vm419, 0.0, %v414
    %vm421 = vcmp.eq.f32.partialorder %v420, inf
    %v422 = vsel %vm421, 3.4028235e+38, %v420
    %vm423 = vcmp.eq.f32.partialorder %v422, -inf
    %v424 = vsel %vm423, -3.4028235e+38, %v422
    %v425 = vmax.f32 %v414, -20.0
    %v426 = vmin.f32 %v425, 2.0
    %vm427 = vcmp.lt.s32.totalorder %v418, 4
    %v428 = vsel %vm427, %v424, %v426
    %vm429 = vcmask 58368
    %430 = vst.msk [vmem:[#allocation11] sm:$0x3] %vm429, %v428
    // Predicated region
    $region42: #{tpu_custom_call.1} parent=1 // pred_check
      _
    $region43: #{tpu_custom_call.1} parent=1 // pred_check_branch
      %432 = sbr.rel (0) target = $region45
    $region44: #{tpu_custom_call.1} parent=1 // pred_region
      %s434 = ssub.s32 32, 32
      %435 = vsyncadd [#allocation4], %s434
      %s437 = sshll.u32 [#allocation11], 4
      %s438 = int_to_ptr.vmem [resolvable:$true] %s437
      %440 = dma.vmem_to_hbm [thread:$0]  %s438, 32, %s5, [#allocation4]
    $region45: #{tpu_custom_call.1} parent=1 // pred_fallthru
      _
    // Predicated region
    $region46: #{tpu_custom_call.1} parent=1 // pred_check
      _
    $region47: #{tpu_custom_call.1} parent=1 // pred_check_branch
      %442 = sbr.rel (0) target = $region49
    $region48: #{tpu_custom_call.1} parent=1 // pred_region
      %443 = dma.done [#allocation4], 32
    $region49: #{tpu_custom_call.1} parent=1 // pred_fallthru
      _
    %444 = vsyncpa [#allocation3], 1
    %445 = vsyncpa [#allocation6], 1
    %446 = vsyncpa [#allocation9], 1
    %447 = vsyncpa [#allocation4], 1

</llo_original>
